<compile_context>
chip_gen: v7x
topology: tpu7x:2x2x1
jax: 0.10.0
libtpu: 0.0.40
codegen_flags: <defaults>
</compile_context>

<pallas_src>
import math
from functools import partial

import jax
import jax.numpy as jnp
from jax.experimental import pallas as pl
from jax.experimental.pallas import tpu as pltpu

HID = 24      # hidden width of the module
LANES = 128   # TPU lane width


def _round_up(a, m):
    return (a + m - 1) // m * m


# ----------------------------------------------------------------------------- kernel


def _make_critic_kernel(s_blk, offs):
    """Build the fused 3-layer MLP kernel for a given packed-slab layout."""
    o_w1, o_b1, o_w2, o_b2, o_w3, o_b3 = offs

    def kernel(x_ref, p_ref, o_ref):
        f32 = jnp.float32
        bf16 = jnp.bfloat16

        x = x_ref[...].astype(bf16)                         # [TB, s_blk]

        b1 = p_ref[o_b1:o_b1 + 1, :].astype(f32)            # [1, 128] (lanes >= 24 are 0)
        b2 = p_ref[o_b2:o_b2 + 1, :].astype(f32)
        b3 = p_ref[o_b3:o_b3 + 1, :].astype(f32)

        # layer 1: [TB, s_blk] @ [s_blk, 128] -> [TB, 128] (lanes >= 24 stay exactly 0)
        h = jnp.dot(x, p_ref[o_w1:o_w1 + s_blk, :],
                    preferred_element_type=f32) + b1
        h = jnp.maximum(h, 0.0).astype(bf16)

        # layer 2: [TB, 128] @ [128, 128] (rows/lanes >= 24 are 0) -> [TB, 128]
        h = jnp.dot(h, p_ref[o_w2:o_w2 + LANES, :],
                    preferred_element_type=f32) + b2
        h = jnp.maximum(h, 0.0).astype(bf16)

        # layer 3: [TB, 128] @ [128, 128] (lanes >= action_dim are 0) -> [TB, 128]
        y = jnp.dot(h, p_ref[o_w3:o_w3 + LANES, :],
                    preferred_element_type=f32) + b3

        o_ref[...] = y                                      # lane-dense full-tile store

    return kernel


# --------------------------------------------------------------------------- wrapper


def pack_params(params, state_dim, action_dim):
    """Pack w1,b1,w2,b2,w3,b3 into one bf16 [rows, 128] slab (done once, host-side).

    Layout (row offsets are multiples of 16 so bf16 (16,128) tiles stay aligned):
      W1: [state_dim, 24] at rows [0, s_blk)
      b1: row o_b1 ;  W2: [24, 24] at rows [o_w2, o_w2+128)
      b2: row o_b2 ;  W3: [24, action_dim] at rows [o_w3, o_w3+128) ; b3: row o_b3
    Everything else is zero, which keeps padded lanes exactly zero through the MLP.
    """
    s_blk = _round_up(max(state_dim, 1), 16)
    o_w1 = 0
    o_b1 = o_w1 + s_blk
    o_w2 = o_b1 + 16
    o_b2 = o_w2 + LANES
    o_w3 = o_b2 + 16
    o_b3 = o_w3 + LANES
    rows = o_b3 + 16

    slab = jnp.zeros((rows, LANES), jnp.float32)
    slab = slab.at[o_w1:o_w1 + state_dim, :HID].set(params["w1"])
    slab = slab.at[o_b1, :HID].set(params["b1"].reshape(-1))
    slab = slab.at[o_w2:o_w2 + HID, :HID].set(params["w2"])
    slab = slab.at[o_b2, :HID].set(params["b2"].reshape(-1))
    slab = slab.at[o_w3:o_w3 + HID, :action_dim].set(params["w3"])
    slab = slab.at[o_b3, :action_dim].set(params["b3"].reshape(-1))

    offs = (o_w1, o_b1, o_w2, o_b2, o_w3, o_b3)
    return slab.astype(jnp.bfloat16), offs, s_blk


@partial(jax.jit, static_argnames=("action_dim", "offs", "s_blk", "block_b"))
def critic_forward(x, slab, *, action_dim, offs, s_blk, block_b=128):
    """x: [B, state_dim] float32.  slab: packed bf16 params from pack_params."""
    B, state_dim = x.shape

    tb = _round_up(min(block_b, _round_up(B, 8)), 8)        # batch tile (multiple of 8)
    b_pad = _round_up(B, tb)

    # Pad batch to a tile multiple and features to the slab's K (zeros are harmless).
    xp = jnp.zeros((b_pad, s_blk), jnp.float32).at[:B, :state_dim].set(
        x.astype(jnp.float32))

    rows = slab.shape[0]
    kernel = _make_critic_kernel(s_blk, offs)

    out = pl.pallas_call(
        kernel,
        out_shape=jax.ShapeDtypeStruct((b_pad, LANES), jnp.float32),
        grid_spec=pltpu.PrefetchScalarGridSpec(
            num_scalar_prefetch=0,
            grid=(b_pad // tb,),
            in_specs=[
                pl.BlockSpec((tb, s_blk), lambda i: (i, 0)),      # batch-tiled input
                pl.BlockSpec((rows, LANES), lambda i: (0, 0)),    # resident param slab
            ],
            out_specs=pl.BlockSpec((tb, LANES), lambda i: (i, 0)),
        ),
        compiler_params=pltpu.CompilerParams(
            dimension_semantics=("parallel",)),                   # dual-TC on v7x
    )(xp, slab)

    return out[:B, :action_dim]


# ------------------------------------------------------------------------ init / refs


def init_params(state_dim, action_dim, seed=0):
    """Mirror of the module's init: W ~ U(-sqrt(6/fan_in), sqrt(6/fan_in)),
    b ~ U(-1/sqrt(fan_in), 1/sqrt(fan_in)).  Stored as [in, out] so y = x @ W + b."""
    key = jax.random.PRNGKey(seed)
    ks = jax.random.split(key, 6)

    def linear(kw, kb, fan_in, fan_out):
        wb = math.sqrt(6.0 / fan_in)
        bb = 1.0 / math.sqrt(fan_in)
        w = jax.random.uniform(kw, (fan_in, fan_out), jnp.float32, -wb, wb)
        b = jax.random.uniform(kb, (1, fan_out), jnp.float32, -bb, bb)
        return w, b

    w1, b1 = linear(ks[0], ks[1], state_dim, HID)
    w2, b2 = linear(ks[2], ks[3], HID, HID)
    w3, b3 = linear(ks[4], ks[5], HID, action_dim)
    return dict(w1=w1, b1=b1, w2=w2, b2=b2, w3=w3, b3=b3)


def critic_forward_ref_f32(x, p):
    h = jnp.maximum(x @ p["w1"] + p["b1"], 0.0)
    h = jnp.maximum(h @ p["w2"] + p["b2"], 0.0)
    return h @ p["w3"] + p["b3"]


def critic_forward_ref_bf16(x, p):
    """Reference with the same bf16-input / f32-accumulate precision as the kernel."""
    bf, f32 = jnp.bfloat16, jnp.float32

    def lin(h, w, b):
        return (jnp.dot(h.astype(bf), w.astype(bf), preferred_element_type=f32)
                + b.astype(bf).astype(f32))

    h = jnp.maximum(lin(x, p["w1"], p["b1"]), 0.0)
    h = jnp.maximum(lin(h, p["w2"], p["b2"]), 0.0)
    return lin(h, p["w3"], p["b3"])


# ------------------------------------------------------------------------------- main


if __name__ == "__main__":
    # CartPole: state_dim=4, action_dim=2.  Use a modest batch so the 1-D grid
    # (block_b=128 -> 2 parallel tiles) is actually exercised.
    state_dim, action_dim, batch = 4, 2, 256

    params = init_params(state_dim, action_dim, seed=0)
    slab, offs, s_blk = pack_params(params, state_dim, action_dim)
    x = jax.random.normal(jax.random.PRNGKey(0), (batch, state_dim), jnp.float32)

    out = critic_forward(x, slab, action_dim=action_dim, offs=offs,
                         s_blk=s_blk, block_b=128)
    out = jax.block_until_ready(out)

    ref_bf16 = critic_forward_ref_bf16(x, params)
    ref_f32 = critic_forward_ref_f32(x, params)

    assert out.shape == (batch, action_dim)
    # Tight check vs. a precision-matched (bf16 matmul, f32 accumulate) reference.
    assert jnp.allclose(out, ref_bf16, atol=1e-2, rtol=1e-2), (
        float(jnp.max(jnp.abs(out - ref_bf16))))
    # Coarse semantic check vs. the pure-f32 reference (bf16 quantization noise only).
    assert jnp.allclose(out, ref_f32, atol=1e-1, rtol=1e-1), (
        float(jnp.max(jnp.abs(out - ref_f32))))

    print("KERNEL_OK")
</pallas_src>

<mosaic_0001>
module attributes {stable_mosaic.version = 11 : i64} {
  func.func @kernel(%arg0: i32, %arg1: memref<128x16xf32, #tpu.memory_space<vmem>>, %arg2: memref<320x128xbf16, #tpu.memory_space<vmem>>, %arg3: memref<128x128xf32, #tpu.memory_space<vmem>>) attributes {dimension_semantics = [#tpu.dimension_semantics<parallel>], iteration_bounds = array<i64: 2>, scalar_prefetch = 0 : i64, scratch_operands = 0 : i64, tpu.core_type = #tpu.core_type<tc>, window_params = [{transform_indices = @transform_0, window_bounds = array<i64: 128, 16>}, {pipeline_mode = #tpu.pipeline_mode<synchronous>, transform_indices = @transform_1, window_bounds = array<i64: 320, 128>}, {transform_indices = @transform_2, window_bounds = array<i64: 128, 128>}]} {
    %c0 = arith.constant 0 : index
    %c0_0 = arith.constant 0 : index
    %0 = vector.load %arg1[%c0, %c0_0] : memref<128x16xf32, #tpu.memory_space<vmem>>, vector<128x16xf32>
    %1 = arith.truncf %0 : vector<128x16xf32> to vector<128x16xbf16>
    %c16 = arith.constant 16 : index
    %c0_1 = arith.constant 0 : index
    %2 = vector.load %arg2[%c16, %c0_1] : memref<320x128xbf16, #tpu.memory_space<vmem>>, vector<1x128xbf16>
    %3 = arith.extf %2 : vector<1x128xbf16> to vector<1x128xf32>
    %c160 = arith.constant 160 : index
    %c0_2 = arith.constant 0 : index
    %4 = vector.load %arg2[%c160, %c0_2] : memref<320x128xbf16, #tpu.memory_space<vmem>>, vector<1x128xbf16>
    %5 = arith.extf %4 : vector<1x128xbf16> to vector<1x128xf32>
    %c304 = arith.constant 304 : index
    %c0_3 = arith.constant 0 : index
    %6 = vector.load %arg2[%c304, %c0_3] : memref<320x128xbf16, #tpu.memory_space<vmem>>, vector<1x128xbf16>
    %7 = arith.extf %6 : vector<1x128xbf16> to vector<1x128xf32>
    %c0_4 = arith.constant 0 : index
    %c0_5 = arith.constant 0 : index
    %8 = vector.load %arg2[%c0_4, %c0_5] : memref<320x128xbf16, #tpu.memory_space<vmem>>, vector<16x128xbf16>
    %cst = arith.constant dense<0.000000e+00> : vector<128x128xf32>
    %9 = tpu.matmul %1, %8, %cst {dimension_numbers = #tpu.dot_dimension_numbers<[1], [0], [0], [1], [0, 0, 1, 1], [], []>} : vector<128x16xbf16>, vector<16x128xbf16>, vector<128x128xf32> -> vector<128x128xf32>
    %10 = vector.broadcast %3 : vector<1x128xf32> to vector<128x128xf32>
    %11 = arith.addf %9, %10 : vector<128x128xf32>
    %cst_6 = arith.constant 0.000000e+00 : f32
    %12 = vector.broadcast %cst_6 : f32 to vector<128x128xf32>
    %13 = arith.maximumf %11, %12 : vector<128x128xf32>
    %14 = arith.truncf %13 : vector<128x128xf32> to vector<128x128xbf16>
    %c32 = arith.constant 32 : index
    %c0_7 = arith.constant 0 : index
    %15 = vector.load %arg2[%c32, %c0_7] : memref<320x128xbf16, #tpu.memory_space<vmem>>, vector<128x128xbf16>
    %cst_8 = arith.constant dense<0.000000e+00> : vector<128x128xf32>
    %16 = tpu.matmul %14, %15, %cst_8 {dimension_numbers = #tpu.dot_dimension_numbers<[1], [0], [0], [1], [0, 0, 1, 1], [], []>} : vector<128x128xbf16>, vector<128x128xbf16>, vector<128x128xf32> -> vector<128x128xf32>
    %17 = vector.broadcast %5 : vector<1x128xf32> to vector<128x128xf32>
    %18 = arith.addf %16, %17 : vector<128x128xf32>
    %cst_9 = arith.constant 0.000000e+00 : f32
    %19 = vector.broadcast %cst_9 : f32 to vector<128x128xf32>
    %20 = arith.maximumf %18, %19 : vector<128x128xf32>
    %21 = arith.truncf %20 : vector<128x128xf32> to vector<128x128xbf16>
    %c176 = arith.constant 176 : index
    %c0_10 = arith.constant 0 : index
    %22 = vector.load %arg2[%c176, %c0_10] : memref<320x128xbf16, #tpu.memory_space<vmem>>, vector<128x128xbf16>
    %cst_11 = arith.constant dense<0.000000e+00> : vector<128x128xf32>
    %23 = tpu.matmul %21, %22, %cst_11 {dimension_numbers = #tpu.dot_dimension_numbers<[1], [0], [0], [1], [0, 0, 1, 1], [], []>} : vector<128x128xbf16>, vector<128x128xbf16>, vector<128x128xf32> -> vector<128x128xf32>
    %24 = vector.broadcast %7 : vector<1x128xf32> to vector<128x128xf32>
    %25 = arith.addf %23, %24 : vector<128x128xf32>
    %c0_12 = arith.constant 0 : index
    %c0_13 = arith.constant 0 : index
    %26 = vector.load %arg3[%c0_12, %c0_13] : memref<128x128xf32, #tpu.memory_space<vmem>>, vector<128x128xf32>
    tpu.vector_store %arg3[%c0_12, %c0_13], %25 {strides = array<i32>} : memref<128x128xf32, #tpu.memory_space<vmem>>, vector<128x128xf32>,
    return
  }
  func.func @transform_0(%arg0: i32) -> (i32, i32) {
    %c0_i32 = arith.constant 0 : i32
    %c0_i32_0 = arith.constant 0 : i32
    return %arg0, %c0_i32 : i32, i32
  }
  func.func @transform_1(%arg0: i32) -> (i32, i32) {
    %c0_i32 = arith.constant 0 : i32
    %c0_i32_0 = arith.constant 0 : i32
    %c0_i32_1 = arith.constant 0 : i32
    return %c0_i32, %c0_i32_0 : i32, i32
  }
  func.func @transform_2(%arg0: i32) -> (i32, i32) {
    %c0_i32 = arith.constant 0 : i32
    %c0_i32_0 = arith.constant 0 : i32
    return %arg0, %c0_i32 : i32, i32
  }
}

</mosaic_0001>

<llo_original>
// kernel: critic_forward.1
$region0: #{critic_forward.1}
  #allocation0 [shape = 'u32[]', space=smem, size = 0x4, offset = 0x4, fixed_abs, tag = 'smem constant byte address 0x4 - core index']
  #allocation1 [shape = 'u32[144,128]{1,0:T(1,128)}', space=vmem, size = 0x12000, scoped, tag = 'internal scratch']
  %s0 = inlined_call_operand.vmem [shape: f32[256,16], index: 0, kind: input, shape index: {}]
  %s1 = inlined_call_operand.vmem [shape: bf16[320,128], index: 1, kind: input, shape index: {}]
  %s2 = inlined_call_operand.vmem [shape: f32[256,128], index: 2, kind: output, shape index: {}]
  %s3 = sld [smem:[#allocation0]]
  $region41: #{critic_forward.1} parent=0
    _
  %s5 = ssub.s32 1, %s3
  %s6 = scalar_select 0, %s5, %s3
  loop: start=0, step=1, limit=4
  $region2: #{critic_forward.1} parent=0 // loop_pre_header
    _
  $region3: #{critic_forward.1} parent=0 // loop_header
    %s8 = sphi 0, %s12
    %p9 = scmp.ge.s32.totalorder %s8, 4
    %s18 = sphi 0, %s20
    %s21 = sphi 0, %s18
    %s22 = sphi 0, %s21
    %s38 = sphi 0, %s22
    %s42 = sphi 0, %s42
    %s44 = sphi 0, %s42
    %s45 = sphi 0, %s44
    %s59 = sphi 0, %s45
    %s65 = sphi 0, %s67
    %s68 = sphi 0, %s65
    %s69 = sphi 0, %s68
    %s85 = sphi 0, %s69
  $region4: #{critic_forward.1} parent=0 // loop_header_branch
    %11 = sbr.rel (%p9) target = $region8
  $region5: #{critic_forward.1} parent=0 // loop_body
    %s13 = ssub.s32 %s8, 1
    %s14 = ssub.s32 %s8, 2
    %s15 = sadd.s32 %s8, 1
    %s16 = ssub.s32 %s8, %s15
    %p17 = scmp.eq.s32.totalorder %s16, 0
    %s19 = sadd.s32 %s18, 1
    %s20 = scalar_select %p17, %s18, %s19
    %p23 = pneg %p17
    %p24 = scmp.eq.s32.totalorder %s8, 1
    %p25 = por %p23, %p24
    %p26 = scmp.ne.s32.totalorder %s18, %s21
    %p27 = scmp.eq.s32.totalorder %s8, 0
    %p28 = por %p26, %p27
    %p29 = scmp.ne.s32.totalorder %s18, %s21
    %p30 = scmp.eq.s32.totalorder %s13, 1
    %p31 = por %p29, %p30
    %p32 = scmp.ne.s32.totalorder %s21, %s22
    %p33 = scmp.eq.s32.totalorder %s13, 0
    %p34 = por %p32, %p33
    %p35 = scmp.ne.s32.totalorder %s21, %s22
    %p36 = scmp.eq.s32.totalorder %s14, 1
    %p37 = por %p35, %p36
    %p39 = scmp.ne.s32.totalorder %s22, %s38
    %p40 = scmp.eq.s32.totalorder %s14, 0
    %p41 = por %p39, %p40
    %s43 = sadd.s32 %s42, 1
    %p46 = scmp.eq.s32.totalorder %s8, 1
    %p47 = scmp.ne.s32.totalorder %s42, %s44
    %p48 = scmp.eq.s32.totalorder %s8, 0
    %p49 = por %p47, %p48
    %p50 = scmp.ne.s32.totalorder %s42, %s44
    %p51 = scmp.eq.s32.totalorder %s13, 1
    %p52 = por %p50, %p51
    %p53 = scmp.ne.s32.totalorder %s44, %s45
    %p54 = scmp.eq.s32.totalorder %s13, 0
    %p55 = por %p53, %p54
    %p56 = scmp.ne.s32.totalorder %s44, %s45
    %p57 = scmp.eq.s32.totalorder %s14, 1
    %p58 = por %p56, %p57
    %p60 = scmp.ne.s32.totalorder %s45, %s59
    %p61 = scmp.eq.s32.totalorder %s14, 0
    %p62 = por %p60, %p61
    %s63 = ssub.s32 %s8, %s15
    %p64 = scmp.eq.s32.totalorder %s63, 0
    %s66 = sadd.s32 %s65, 1
    %s67 = scalar_select %p64, %s65, %s66
    %p70 = pneg %p64
    %p71 = scmp.eq.s32.totalorder %s8, 1
    %p72 = por %p70, %p71
    %p73 = scmp.ne.s32.totalorder %s65, %s68
    %p74 = scmp.eq.s32.totalorder %s8, 0
    %p75 = por %p73, %p74
    %p76 = scmp.ne.s32.totalorder %s65, %s68
    %p77 = scmp.eq.s32.totalorder %s13, 1
    %p78 = por %p76, %p77
    %p79 = scmp.ne.s32.totalorder %s68, %s69
    %p80 = scmp.eq.s32.totalorder %s13, 0
    %p81 = por %p79, %p80
    %p82 = scmp.ne.s32.totalorder %s68, %s69
    %p83 = scmp.eq.s32.totalorder %s14, 1
    %p84 = por %p82, %p83
    %p86 = scmp.ne.s32.totalorder %s69, %s85
    %p87 = scmp.eq.s32.totalorder %s14, 0
    %p88 = por %p86, %p87
    %p89 = scmp.le.s32.totalorder 1, %s8
    %p90 = scmp.lt.s32.totalorder %s8, 3
    %p91 = pnand %p89, %p90
    %p92 = pneg %p91
    // Predicated region
    $region9: #{critic_forward.1} parent=5 // pred_check
      _
    $region10: #{critic_forward.1} parent=5 // pred_check_branch
      %94 = sbr.rel (%p91) target = $region12
    $region11: #{critic_forward.1} parent=5 // pred_region
      %s95 = ssub.s32 %s8, 1
      // Predicated region
      $region13: #{critic_forward.1} parent=11 // pred_check
        %p96 = pneg %p55
      $region14: #{critic_forward.1} parent=11 // pred_check_branch
        %98 = sbr.rel (%p96) target = $region16
      $region15: #{critic_forward.1} parent=11 // pred_region
        _
      $region16: #{critic_forward.1} parent=11 // pred_fallthru
        _
    $region12: #{critic_forward.1} parent=5 // pred_fallthru
      _
    %p99 = scmp.lt.s32.totalorder %s8, 2
    // Predicated region
    $region17: #{critic_forward.1} parent=5 // pred_check
      %p100 = pneg %p99
    $region18: #{critic_forward.1} parent=5 // pred_check_branch
      %102 = sbr.rel (%p100) target = $region20
    $region19: #{critic_forward.1} parent=5 // pred_region
      // Predicated region
      $region21: #{critic_forward.1} parent=19 // pred_check
        %p103 = pneg %p28
      $region22: #{critic_forward.1} parent=19 // pred_check_branch
        %105 = sbr.rel (%p103) target = $region24
      $region23: #{critic_forward.1} parent=19 // pred_region
        %s106 = smul.u32 16, %s8
        %p107 = scmp.lt.s32.totalorder %s106, 31
        %s108 = scalar_select %p107, %s106, 31
        %s109 = smul.addr %s108, 8
        %s110 = scalar_lea.vmem %s0, %s109
        %s111 = smul.u32 16, %s8
      $region24: #{critic_forward.1} parent=19 // pred_fallthru
        _
    $region20: #{critic_forward.1} parent=5 // pred_fallthru
      _
    %p112 = scmp.le.s32.totalorder 1, %s8
    %p113 = scmp.lt.s32.totalorder %s8, 3
    %p114 = pnand %p112, %p113
    %p115 = pneg %p114
    // Predicated region
    $region25: #{critic_forward.1} parent=5 // pred_check
      _
    $region26: #{critic_forward.1} parent=5 // pred_check_branch
      %117 = sbr.rel (%p114) target = $region28
    $region27: #{critic_forward.1} parent=5 // pred_region
      %s118 = ssub.s32 %s8, 1
      %s119 = smul.u32 16, %s13
      %p120 = scmp.lt.s32.totalorder %s119, 31
      %s121 = scalar_select %p120, %s119, 31
      %s122 = smul.addr %s121, 8
      %s123 = scalar_lea.vmem %s0, %s122
      %p124 = pneg %p34
      %p125 = pneg %p31
      %p126 = pneg %p55
      %p127 = pneg %p52
      %p128 = pneg %p81
      %p129 = pneg %p78
      %s130 = smul.u32 16, %s13
      %p131 = scmp.lt.s32.totalorder %s130, 31
      %s132 = scalar_select %p131, %s130, 31
      %s133 = smul.addr %s132, 8
      %s134 = scalar_lea.vmem %s2, %s133
      %s135 = smul.u32 16, %s13
      %p136 = scmp.lt.s32.totalorder %s135, 31
      %s137 = scalar_select %p136, %s135, 31
      %s138 = smul.addr %s137, 8
      %s139 = scalar_lea.vmem %s0, %s138
      %s140 = smul.u32 16, %s13
      %s141 = smul.u32 16, %s13
      %p142 = scmp.lt.s32.totalorder %s141, 31
      %s143 = scalar_select %p142, %s141, 31
      %s144 = smul.addr %s143, 8
      %s145 = scalar_lea.vmem %s2, %s144
      %s146 = smul.u32 16, %s13
      %v148 = vld [vmem:[%s139] sm:$0xff]
      %v149 = vld [vmem:[%s139 + $0x8] sm:$0xff]
      %v150 = vld [vmem:[%s139 + $0x10] sm:$0xff]
      %v151 = vld [vmem:[%s139 + $0x18] sm:$0xff]
      %v152 = vld [vmem:[%s139 + $0x20] sm:$0xff]
      %v153 = vld [vmem:[%s139 + $0x28] sm:$0xff]
      %v154 = vld [vmem:[%s139 + $0x30] sm:$0xff]
      %v155 = vld [vmem:[%s139 + $0x38] sm:$0xff]
      %v156 = vld [vmem:[%s139 + $0x40] sm:$0xff]
      %v157 = vld [vmem:[%s139 + $0x48] sm:$0xff]
      %v158 = vld [vmem:[%s139 + $0x50] sm:$0xff]
      %v159 = vld [vmem:[%s139 + $0x58] sm:$0xff]
      %v160 = vld [vmem:[%s139 + $0x60] sm:$0xff]
      %v161 = vld [vmem:[%s139 + $0x68] sm:$0xff]
      %v162 = vld [vmem:[%s139 + $0x70] sm:$0xff]
      %v163 = vld [vmem:[%s139 + $0x78] sm:$0xff]
      %v164 = vpack.c.bf16 %v149, %v148
      %v165 = vpack.c.bf16 %v151, %v150
      %v166 = vpack.c.bf16 %v153, %v152
      %v167 = vpack.c.bf16 %v155, %v154
      %v168 = vpack.c.bf16 %v157, %v156
      %v169 = vpack.c.bf16 %v159, %v158
      %v170 = vpack.c.bf16 %v161, %v160
      %v171 = vpack.c.bf16 %v163, %v162
      %v172 = vld [vmem:[%s1 + $0x8] sm:$0x1]
      %v173 = vunpack.c.l.bf16 %v172
      %v174 = vld [vmem:[%s1 + $0x50] sm:$0x1]
      %v175 = vunpack.c.l.bf16 %v174
      %v176 = vld [vmem:[%s1 + $0x98] sm:$0x1]
      %v177 = vunpack.c.l.bf16 %v176
      %v178 = vld [vmem:[%s1] sm:$0xf]
      %v179 = vld [vmem:[%s1 + $0x4] sm:$0xf]
      %v180 = vlaneseq
      %v181 = vshrl.u32 %v180, 7
      %v182 = vsub.s32 0, %v181
      %v183 = vrot.slane %v173, %v182
      %v186 = vunpack.c.l.b16 %v178
      %v187 = vunpack.c.l.b16 %v179
      %v188 = vpack.c.b16 %v187, %v186
      %vm190 = vcmask 130048
      %v192 = vsel %vm190, %v164, 0
      %v195 = vsel %vm190, %v165, 0
      %v198 = vsel %vm190, %v166, 0
      %v201 = vsel %vm190, %v167, 0
      %v204 = vsel %vm190, %v168, 0
      %v207 = vsel %vm190, %v169, 0
      %v210 = vsel %vm190, %v170, 0
      %v213 = vsel %vm190, %v171, 0
      %215 = vmatprep.subr.bf16.mxu0 0
      %216 = vmatpush1.bf16.msra.mxu0 %v188
      %217 = vmatprep.subr.bf16.mxu0 0
      %218 = vmatpush1.bf16.msra.mxu0 0
      %219 = vmatprep.subr.bf16.mxu0 0
      %220 = vmatpush1.bf16.msra.mxu0 0
      %221 = vmatprep.subr.bf16.mxu0 0
      %222 = vmatpush1.bf16.msra.mxu0 0
      %223 = vmatprep.subr.bf16.mxu0 0
      %224 = vmatpush1.bf16.msra.mxu0 0
      %225 = vmatprep.subr.bf16.mxu0 0
      %226 = vmatpush1.bf16.msra.mxu0 0
      %227 = vmatprep.subr.bf16.mxu0 0
      %228 = vmatpush1.bf16.msra.mxu0 0
      %229 = vmatprep.subr.bf16.mxu0 0
      %230 = vmatpush1.bf16.msra.mxu0 0
      %231 = vmatprep.subr.bf16.mxu0 0
      %232 = vmatpush1.bf16.msra.mxu0 0
      %233 = vmatprep.subr.bf16.mxu0 0
      %234 = vmatpush1.bf16.msra.mxu0 0
      %235 = vmatprep.subr.bf16.mxu0 0
      %236 = vmatpush1.bf16.msra.mxu0 0
      %237 = vmatprep.subr.bf16.mxu0 0
      %238 = vmatpush1.bf16.msra.mxu0 0
      %239 = vmatprep.subr.bf16.mxu0 0
      %240 = vmatpush1.bf16.msra.mxu0 0
      %241 = vmatprep.subr.bf16.mxu0 0
      %242 = vmatpush1.bf16.msra.mxu0 0
      %243 = vmatprep.subr.bf16.mxu0 0
      %244 = vmatpush1.bf16.msra.mxu0 0
      %245 = vmatprep.subr.bf16.mxu0 0
      %246 = vmatpush1.bf16.msra.mxu0 0
      %247 = vmatprep.mubr.bf16.mxu0 0
      %248 = vmatmul.mubr.bf16.gmra.mrb[0].mxu0 %v192
      %v249 = vpop.f32.mrb[0].mxu0
      %v250 = vadd.f32 %v183, %v249
      %v251 = vpop.f32.mrb[0].mxu0
      %v252 = vpop.f32.mrb[0].mxu0
      %v253 = vadd.f32 %v183, %v252
      %v254 = vpop.f32.mrb[0].mxu0
      %255 = vmatprep.mubr.bf16.mxu0 0
      %256 = vmatmul.mubr.bf16.gmra.mrb[0].mxu0 %v195
      %v257 = vpop.f32.mrb[0].mxu0
      %v258 = vadd.f32 %v183, %v257
      %v259 = vpop.f32.mrb[0].mxu0
      %v260 = vpop.f32.mrb[0].mxu0
      %v261 = vadd.f32 %v183, %v260
      %v262 = vpop.f32.mrb[0].mxu0
      %263 = vmatprep.mubr.bf16.mxu0 0
      %264 = vmatmul.mubr.bf16.gmra.mrb[0].mxu0 %v198
      %v265 = vpop.f32.mrb[0].mxu0
      %v266 = vadd.f32 %v183, %v265
      %v267 = vpop.f32.mrb[0].mxu0
      %v268 = vpop.f32.mrb[0].mxu0
      %v269 = vadd.f32 %v183, %v268
      %v270 = vpop.f32.mrb[0].mxu0
      %271 = vmatprep.mubr.bf16.mxu0 0
      %272 = vmatmul.mubr.bf16.gmra.mrb[0].mxu0 %v201
      %v273 = vpop.f32.mrb[0].mxu0
      %v274 = vadd.f32 %v183, %v273
      %v275 = vpop.f32.mrb[0].mxu0
      %v276 = vpop.f32.mrb[0].mxu0
      %v277 = vadd.f32 %v183, %v276
      %v278 = vpop.f32.mrb[0].mxu0
      %279 = vmatprep.mubr.bf16.mxu0 0
      %280 = vmatmul.mubr.bf16.gmra.mrb[0].mxu0 %v204
      %v281 = vpop.f32.mrb[0].mxu0
      %v282 = vadd.f32 %v183, %v281
      %v283 = vpop.f32.mrb[0].mxu0
      %v284 = vpop.f32.mrb[0].mxu0
      %v285 = vadd.f32 %v183, %v284
      %v286 = vpop.f32.mrb[0].mxu0
      %287 = vmatprep.mubr.bf16.mxu0 0
      %288 = vmatmul.mubr.bf16.gmra.mrb[0].mxu0 %v207
      %v289 = vpop.f32.mrb[0].mxu0
      %v290 = vadd.f32 %v183, %v289
      %v291 = vpop.f32.mrb[0].mxu0
      %v292 = vpop.f32.mrb[0].mxu0
      %v293 = vadd.f32 %v183, %v292
      %v294 = vpop.f32.mrb[0].mxu0
      %295 = vmatprep.mubr.bf16.mxu0 0
      %296 = vmatmul.mubr.bf16.gmra.mrb[0].mxu0 %v210
      %v297 = vpop.f32.mrb[0].mxu0
      %v298 = vadd.f32 %v183, %v297
      %v299 = vpop.f32.mrb[0].mxu0
      %v300 = vpop.f32.mrb[0].mxu0
      %v301 = vadd.f32 %v183, %v300
      %v302 = vpop.f32.mrb[0].mxu0
      %303 = vmatprep.mubr.bf16.mxu0 0
      %304 = vmatmul.mubr.bf16.gmra.mrb[0].mxu0 %v213
      %v305 = vpop.f32.mrb[0].mxu0
      %v306 = vadd.f32 %v183, %v305
      %v307 = vpop.f32.mrb[0].mxu0
      %v308 = vpop.f32.mrb[0].mxu0
      %v309 = vadd.f32 %v183, %v308
      %v310 = vpop.f32.mrb[0].mxu0
      %311 = vdwg.mxu0
      %v312 = vmax.f32 %v250, 0.0
      %v313 = vmax.f32 %v253, 0.0
      %v314 = vmax.f32 %v258, 0.0
      %v315 = vmax.f32 %v261, 0.0
      %v316 = vmax.f32 %v266, 0.0
      %v317 = vmax.f32 %v269, 0.0
      %v318 = vmax.f32 %v274, 0.0
      %v319 = vmax.f32 %v277, 0.0
      %v320 = vmax.f32 %v282, 0.0
      %v321 = vmax.f32 %v285, 0.0
      %v322 = vmax.f32 %v290, 0.0
      %v323 = vmax.f32 %v293, 0.0
      %v324 = vmax.f32 %v298, 0.0
      %v325 = vmax.f32 %v301, 0.0
      %v326 = vmax.f32 %v306, 0.0
      %v327 = vmax.f32 %v309, 0.0
      %v328 = vpack.c.bf16 %v313, %v312
      %v329 = vpack.c.bf16 %v315, %v314
      %v330 = vpack.c.bf16 %v317, %v316
      %v331 = vpack.c.bf16 %v319, %v318
      %v332 = vpack.c.bf16 %v321, %v320
      %v333 = vpack.c.bf16 %v323, %v322
      %v334 = vpack.c.bf16 %v325, %v324
      %v335 = vpack.c.bf16 %v327, %v326
      %v336 = vld [vmem:[%s1 + $0x10] sm:$0xf]
      %v337 = vld [vmem:[%s1 + $0x14] sm:$0xf]
      %v338 = vld [vmem:[%s1 + $0x18] sm:$0xf]
      %v339 = vld [vmem:[%s1 + $0x1c] sm:$0xf]
      %v340 = vld [vmem:[%s1 + $0x20] sm:$0xf]
      %v341 = vld [vmem:[%s1 + $0x24] sm:$0xf]
      %v342 = vld [vmem:[%s1 + $0x28] sm:$0xf]
      %v343 = vld [vmem:[%s1 + $0x2c] sm:$0xf]
      %v344 = vld [vmem:[%s1 + $0x30] sm:$0xf]
      %v345 = vld [vmem:[%s1 + $0x34] sm:$0xf]
      %v346 = vld [vmem:[%s1 + $0x38] sm:$0xf]
      %v347 = vld [vmem:[%s1 + $0x3c] sm:$0xf]
      %v348 = vld [vmem:[%s1 + $0x40] sm:$0xf]
      %v349 = vld [vmem:[%s1 + $0x44] sm:$0xf]
      %v350 = vld [vmem:[%s1 + $0x48] sm:$0xf]
      %v351 = vld [vmem:[%s1 + $0x4c] sm:$0xf]
      %v352 = vlaneseq
      %v353 = vshrl.u32 %v352, 7
      %v354 = vsub.s32 0, %v353
      %v355 = vrot.slane %v175, %v354
      %v372 = vunpack.c.l.b16 %v336
      %v373 = vunpack.c.l.b16 %v337
      %v374 = vunpack.c.l.b16 %v338
      %v375 = vunpack.c.l.b16 %v339
      %v376 = vunpack.c.l.b16 %v340
      %v377 = vunpack.c.l.b16 %v341
      %v378 = vunpack.c.l.b16 %v342
      %v379 = vunpack.c.l.b16 %v343
      %v380 = vunpack.c.l.b16 %v344
      %v381 = vunpack.c.l.b16 %v345
      %v382 = vunpack.c.l.b16 %v346
      %v383 = vunpack.c.l.b16 %v347
      %v384 = vunpack.c.l.b16 %v348
      %v385 = vunpack.c.l.b16 %v349
      %v386 = vunpack.c.l.b16 %v350
      %v387 = vunpack.c.l.b16 %v351
      %v388 = vpack.c.b16 %v373, %v372
      %v389 = vpack.c.b16 %v375, %v374
      %v390 = vpack.c.b16 %v377, %v376
      %v391 = vpack.c.b16 %v379, %v378
      %v392 = vpack.c.b16 %v381, %v380
      %v393 = vpack.c.b16 %v383, %v382
      %v394 = vpack.c.b16 %v385, %v384
      %v395 = vpack.c.b16 %v387, %v386
      %404 = vmatprep.subr.bf16.mxu0 0
      %405 = vmatpush1.bf16.msra.mxu0 %v388
      %406 = vmatprep.subr.bf16.mxu0 0
      %407 = vmatpush1.bf16.msra.mxu0 %v389
      %408 = vmatprep.subr.bf16.mxu0 0
      %409 = vmatpush1.bf16.msra.mxu0 %v390
      %410 = vmatprep.subr.bf16.mxu0 0
      %411 = vmatpush1.bf16.msra.mxu0 %v391
      %412 = vmatprep.subr.bf16.mxu0 0
      %413 = vmatpush1.bf16.msra.mxu0 %v392
      %414 = vmatprep.subr.bf16.mxu0 0
      %415 = vmatpush1.bf16.msra.mxu0 %v393
      %416 = vmatprep.subr.bf16.mxu0 0
      %417 = vmatpush1.bf16.msra.mxu0 %v394
      %418 = vmatprep.subr.bf16.mxu0 0
      %419 = vmatpush1.bf16.msra.mxu0 %v395
      %420 = vmatprep.subr.bf16.mxu0 0
      %421 = vmatpush1.bf16.msra.mxu0 0
      %422 = vmatprep.subr.bf16.mxu0 0
      %423 = vmatpush1.bf16.msra.mxu0 0
      %424 = vmatprep.subr.bf16.mxu0 0
      %425 = vmatpush1.bf16.msra.mxu0 0
      %426 = vmatprep.subr.bf16.mxu0 0
      %427 = vmatpush1.bf16.msra.mxu0 0
      %428 = vmatprep.subr.bf16.mxu0 0
      %429 = vmatpush1.bf16.msra.mxu0 0
      %430 = vmatprep.subr.bf16.mxu0 0
      %431 = vmatpush1.bf16.msra.mxu0 0
      %432 = vmatprep.subr.bf16.mxu0 0
      %433 = vmatpush1.bf16.msra.mxu0 0
      %434 = vmatprep.subr.bf16.mxu0 0
      %435 = vmatpush1.bf16.msra.mxu0 0
      %436 = vmatprep.mubr.bf16.mxu0 0
      %437 = vmatmul.mubr.bf16.gmra.mrb[0].mxu0 %v328
      %v438 = vpop.f32.mrb[0].mxu0
      %v439 = vadd.f32 %v355, %v438
      %v440 = vpop.f32.mrb[0].mxu0
      %v441 = vpop.f32.mrb[0].mxu0
      %v442 = vadd.f32 %v355, %v441
      %v443 = vpop.f32.mrb[0].mxu0
      %444 = vmatprep.mubr.bf16.mxu0 0
      %445 = vmatmul.mubr.bf16.gmra.mrb[0].mxu0 %v329
      %v446 = vpop.f32.mrb[0].mxu0
      %v447 = vadd.f32 %v355, %v446
      %v448 = vpop.f32.mrb[0].mxu0
      %v449 = vpop.f32.mrb[0].mxu0
      %v450 = vadd.f32 %v355, %v449
      %v451 = vpop.f32.mrb[0].mxu0
      %452 = vmatprep.mubr.bf16.mxu0 0
      %453 = vmatmul.mubr.bf16.gmra.mrb[0].mxu0 %v330
      %v454 = vpop.f32.mrb[0].mxu0
      %v455 = vadd.f32 %v355, %v454
      %v456 = vpop.f32.mrb[0].mxu0
      %v457 = vpop.f32.mrb[0].mxu0
      %v458 = vadd.f32 %v355, %v457
      %v459 = vpop.f32.mrb[0].mxu0
      %460 = vmatprep.mubr.bf16.mxu0 0
      %461 = vmatmul.mubr.bf16.gmra.mrb[0].mxu0 %v331
      %v462 = vpop.f32.mrb[0].mxu0
      %v463 = vadd.f32 %v355, %v462
      %v464 = vpop.f32.mrb[0].mxu0
      %v465 = vpop.f32.mrb[0].mxu0
      %v466 = vadd.f32 %v355, %v465
      %v467 = vpop.f32.mrb[0].mxu0
      %468 = vmatprep.mubr.bf16.mxu0 0
      %469 = vmatmul.mubr.bf16.gmra.mrb[0].mxu0 %v332
      %v470 = vpop.f32.mrb[0].mxu0
      %v471 = vadd.f32 %v355, %v470
      %v472 = vpop.f32.mrb[0].mxu0
      %v473 = vpop.f32.mrb[0].mxu0
      %v474 = vadd.f32 %v355, %v473
      %v475 = vpop.f32.mrb[0].mxu0
      %476 = vmatprep.mubr.bf16.mxu0 0
      %477 = vmatmul.mubr.bf16.gmra.mrb[0].mxu0 %v333
      %v478 = vpop.f32.mrb[0].mxu0
      %v479 = vadd.f32 %v355, %v478
      %v480 = vpop.f32.mrb[0].mxu0
      %v481 = vpop.f32.mrb[0].mxu0
      %v482 = vadd.f32 %v355, %v481
      %v483 = vpop.f32.mrb[0].mxu0
      %484 = vmatprep.mubr.bf16.mxu0 0
      %485 = vmatmul.mubr.bf16.gmra.mrb[0].mxu0 %v334
      %v486 = vpop.f32.mrb[0].mxu0
      %v487 = vadd.f32 %v355, %v486
      %v488 = vpop.f32.mrb[0].mxu0
      %v489 = vpop.f32.mrb[0].mxu0
      %v490 = vadd.f32 %v355, %v489
      %v491 = vpop.f32.mrb[0].mxu0
      %492 = vmatprep.mubr.bf16.mxu0 0
      %493 = vmatmul.mubr.bf16.gmra.mrb[0].mxu0 %v335
      %v494 = vpop.f32.mrb[0].mxu0
      %v495 = vadd.f32 %v355, %v494
      %v496 = vpop.f32.mrb[0].mxu0
      %v497 = vpop.f32.mrb[0].mxu0
      %v498 = vadd.f32 %v355, %v497
      %v499 = vpop.f32.mrb[0].mxu0
      %500 = vdwg.mxu0
      %v501 = vmax.f32 %v439, 0.0
      %v502 = vmax.f32 %v442, 0.0
      %v503 = vmax.f32 %v447, 0.0
      %v504 = vmax.f32 %v450, 0.0
      %v505 = vmax.f32 %v455, 0.0
      %v506 = vmax.f32 %v458, 0.0
      %v507 = vmax.f32 %v463, 0.0
      %v508 = vmax.f32 %v466, 0.0
      %v509 = vmax.f32 %v471, 0.0
      %v510 = vmax.f32 %v474, 0.0
      %v511 = vmax.f32 %v479, 0.0
      %v512 = vmax.f32 %v482, 0.0
      %v513 = vmax.f32 %v487, 0.0
      %v514 = vmax.f32 %v490, 0.0
      %v515 = vmax.f32 %v495, 0.0
      %v516 = vmax.f32 %v498, 0.0
      %v517 = vpack.c.bf16 %v502, %v501
      %v518 = vpack.c.bf16 %v504, %v503
      %v519 = vpack.c.bf16 %v506, %v505
      %v520 = vpack.c.bf16 %v508, %v507
      %v521 = vpack.c.bf16 %v510, %v509
      %v522 = vpack.c.bf16 %v512, %v511
      %v523 = vpack.c.bf16 %v514, %v513
      %v524 = vpack.c.bf16 %v516, %v515
      %v525 = vld [vmem:[%s1 + $0x58] sm:$0xf]
      %v526 = vld [vmem:[%s1 + $0x5c] sm:$0xf]
      %v527 = vld [vmem:[%s1 + $0x60] sm:$0xf]
      %v528 = vld [vmem:[%s1 + $0x64] sm:$0xf]
      %v529 = vld [vmem:[%s1 + $0x68] sm:$0xf]
      %v530 = vld [vmem:[%s1 + $0x6c] sm:$0xf]
      %v531 = vld [vmem:[%s1 + $0x70] sm:$0xf]
      %v532 = vld [vmem:[%s1 + $0x74] sm:$0xf]
      %v533 = vld [vmem:[%s1 + $0x78] sm:$0xf]
      %v534 = vld [vmem:[%s1 + $0x7c] sm:$0xf]
      %v535 = vld [vmem:[%s1 + $0x80] sm:$0xf]
      %v536 = vld [vmem:[%s1 + $0x84] sm:$0xf]
      %v537 = vld [vmem:[%s1 + $0x88] sm:$0xf]
      %v538 = vld [vmem:[%s1 + $0x8c] sm:$0xf]
      %v539 = vld [vmem:[%s1 + $0x90] sm:$0xf]
      %v540 = vld [vmem:[%s1 + $0x94] sm:$0xf]
      %v541 = vlaneseq
      %v542 = vshrl.u32 %v541, 7
      %v543 = vsub.s32 0, %v542
      %v544 = vrot.slane %v177, %v543
      %v561 = vunpack.c.l.b16 %v525
      %v562 = vunpack.c.l.b16 %v526
      %v563 = vunpack.c.l.b16 %v527
      %v564 = vunpack.c.l.b16 %v528
      %v565 = vunpack.c.l.b16 %v529
      %v566 = vunpack.c.l.b16 %v530
      %v567 = vunpack.c.l.b16 %v531
      %v568 = vunpack.c.l.b16 %v532
      %v569 = vunpack.c.l.b16 %v533
      %v570 = vunpack.c.l.b16 %v534
      %v571 = vunpack.c.l.b16 %v535
      %v572 = vunpack.c.l.b16 %v536
      %v573 = vunpack.c.l.b16 %v537
      %v574 = vunpack.c.l.b16 %v538
      %v575 = vunpack.c.l.b16 %v539
      %v576 = vunpack.c.l.b16 %v540
      %v577 = vpack.c.b16 %v562, %v561
      %v578 = vpack.c.b16 %v564, %v563
      %v579 = vpack.c.b16 %v566, %v565
      %v580 = vpack.c.b16 %v568, %v567
      %v581 = vpack.c.b16 %v570, %v569
      %v582 = vpack.c.b16 %v572, %v571
      %v583 = vpack.c.b16 %v574, %v573
      %v584 = vpack.c.b16 %v576, %v575
      %593 = vmatprep.subr.bf16.mxu0 0
      %594 = vmatpush1.bf16.msra.mxu0 %v577
      %595 = vmatprep.subr.bf16.mxu0 0
      %596 = vmatpush1.bf16.msra.mxu0 %v578
      %597 = vmatprep.subr.bf16.mxu0 0
      %598 = vmatpush1.bf16.msra.mxu0 %v579
      %599 = vmatprep.subr.bf16.mxu0 0
      %600 = vmatpush1.bf16.msra.mxu0 %v580
      %601 = vmatprep.subr.bf16.mxu0 0
      %602 = vmatpush1.bf16.msra.mxu0 %v581
      %603 = vmatprep.subr.bf16.mxu0 0
      %604 = vmatpush1.bf16.msra.mxu0 %v582
      %605 = vmatprep.subr.bf16.mxu0 0
      %606 = vmatpush1.bf16.msra.mxu0 %v583
      %607 = vmatprep.subr.bf16.mxu0 0
      %608 = vmatpush1.bf16.msra.mxu0 %v584
      %609 = vmatprep.subr.bf16.mxu0 0
      %610 = vmatpush1.bf16.msra.mxu0 0
      %611 = vmatprep.subr.bf16.mxu0 0
      %612 = vmatpush1.bf16.msra.mxu0 0
      %613 = vmatprep.subr.bf16.mxu0 0
      %614 = vmatpush1.bf16.msra.mxu0 0
      %615 = vmatprep.subr.bf16.mxu0 0
      %616 = vmatpush1.bf16.msra.mxu0 0
      %617 = vmatprep.subr.bf16.mxu0 0
      %618 = vmatpush1.bf16.msra.mxu0 0
      %619 = vmatprep.subr.bf16.mxu0 0
      %620 = vmatpush1.bf16.msra.mxu0 0
      %621 = vmatprep.subr.bf16.mxu0 0
      %622 = vmatpush1.bf16.msra.mxu0 0
      %623 = vmatprep.subr.bf16.mxu0 0
      %624 = vmatpush1.bf16.msra.mxu0 0
      %625 = vmatprep.mubr.bf16.mxu0 0
      %626 = vmatmul.mubr.bf16.gmra.mrb[0].mxu0 %v517
      %v627 = vpop.f32.mrb[0].mxu0
      %v628 = vadd.f32 %v544, %v627
      %v629 = vpop.f32.mrb[0].mxu0
      %v630 = vpop.f32.mrb[0].mxu0
      %v631 = vadd.f32 %v544, %v630
      %v632 = vpop.f32.mrb[0].mxu0
      %633 = vmatprep.mubr.bf16.mxu0 0
      %634 = vmatmul.mubr.bf16.gmra.mrb[0].mxu0 %v518
      %v635 = vpop.f32.mrb[0].mxu0
      %v636 = vadd.f32 %v544, %v635
      %v637 = vpop.f32.mrb[0].mxu0
      %v638 = vpop.f32.mrb[0].mxu0
      %v639 = vadd.f32 %v544, %v638
      %v640 = vpop.f32.mrb[0].mxu0
      %641 = vmatprep.mubr.bf16.mxu0 0
      %642 = vmatmul.mubr.bf16.gmra.mrb[0].mxu0 %v519
      %v643 = vpop.f32.mrb[0].mxu0
      %v644 = vadd.f32 %v544, %v643
      %v645 = vpop.f32.mrb[0].mxu0
      %v646 = vpop.f32.mrb[0].mxu0
      %v647 = vadd.f32 %v544, %v646
      %v648 = vpop.f32.mrb[0].mxu0
      %649 = vmatprep.mubr.bf16.mxu0 0
      %650 = vmatmul.mubr.bf16.gmra.mrb[0].mxu0 %v520
      %v651 = vpop.f32.mrb[0].mxu0
      %v652 = vadd.f32 %v544, %v651
      %v653 = vpop.f32.mrb[0].mxu0
      %v654 = vpop.f32.mrb[0].mxu0
      %v655 = vadd.f32 %v544, %v654
      %v656 = vpop.f32.mrb[0].mxu0
      %657 = vmatprep.mubr.bf16.mxu0 0
      %658 = vmatmul.mubr.bf16.gmra.mrb[0].mxu0 %v521
      %v659 = vpop.f32.mrb[0].mxu0
      %v660 = vadd.f32 %v544, %v659
      %v661 = vpop.f32.mrb[0].mxu0
      %v662 = vpop.f32.mrb[0].mxu0
      %v663 = vadd.f32 %v544, %v662
      %v664 = vpop.f32.mrb[0].mxu0
      %665 = vmatprep.mubr.bf16.mxu0 0
      %666 = vmatmul.mubr.bf16.gmra.mrb[0].mxu0 %v522
      %v667 = vpop.f32.mrb[0].mxu0
      %v668 = vadd.f32 %v544, %v667
      %v669 = vpop.f32.mrb[0].mxu0
      %v670 = vpop.f32.mrb[0].mxu0
      %v671 = vadd.f32 %v544, %v670
      %v672 = vpop.f32.mrb[0].mxu0
      %673 = vmatprep.mubr.bf16.mxu0 0
      %674 = vmatmul.mubr.bf16.gmra.mrb[0].mxu0 %v523
      %v675 = vpop.f32.mrb[0].mxu0
      %v676 = vadd.f32 %v544, %v675
      %v677 = vpop.f32.mrb[0].mxu0
      %v678 = vpop.f32.mrb[0].mxu0
      %v679 = vadd.f32 %v544, %v678
      %v680 = vpop.f32.mrb[0].mxu0
      %681 = vmatprep.mubr.bf16.mxu0 0
      %682 = vmatmul.mubr.bf16.gmra.mrb[0].mxu0 %v524
      %v683 = vpop.f32.mrb[0].mxu0
      %v684 = vadd.f32 %v544, %v683
      %v685 = vpop.f32.mrb[0].mxu0
      %v686 = vpop.f32.mrb[0].mxu0
      %v687 = vadd.f32 %v544, %v686
      %v688 = vpop.f32.mrb[0].mxu0
      %689 = vdwg.mxu0
      %690 = vst [vmem:[%s145] sm:$0xff] %v628
      %691 = vst [vmem:[%s145 + $0x8] sm:$0xff] %v631
      %692 = vst [vmem:[%s145 + $0x10] sm:$0xff] %v636
      %693 = vst [vmem:[%s145 + $0x18] sm:$0xff] %v639
      %694 = vst [vmem:[%s145 + $0x20] sm:$0xff] %v644
      %695 = vst [vmem:[%s145 + $0x28] sm:$0xff] %v647
      %696 = vst [vmem:[%s145 + $0x30] sm:$0xff] %v652
      %697 = vst [vmem:[%s145 + $0x38] sm:$0xff] %v655
      %698 = vst [vmem:[%s145 + $0x40] sm:$0xff] %v660
      %699 = vst [vmem:[%s145 + $0x48] sm:$0xff] %v663
      %700 = vst [vmem:[%s145 + $0x50] sm:$0xff] %v668
      %701 = vst [vmem:[%s145 + $0x58] sm:$0xff] %v671
      %702 = vst [vmem:[%s145 + $0x60] sm:$0xff] %v676
      %703 = vst [vmem:[%s145 + $0x68] sm:$0xff] %v679
      %704 = vst [vmem:[%s145 + $0x70] sm:$0xff] %v684
      %705 = vst [vmem:[%s145 + $0x78] sm:$0xff] %v687
      %s706 = smul.u32 16, %s13
      %p707 = scmp.lt.s32.totalorder %s706, 31
      %s708 = scalar_select %p707, %s706, 31
      %s709 = smul.addr %s708, 8
      %s710 = scalar_lea.vmem %s2, %s709
      // Predicated region
      $region29: #{critic_forward.1} parent=27 // pred_check
        %p711 = pneg %p78
      $region30: #{critic_forward.1} parent=27 // pred_check_branch
        %713 = sbr.rel (%p711) target = $region32
      $region31: #{critic_forward.1} parent=27 // pred_region
        %s714 = smul.u32 16, %s13
      $region32: #{critic_forward.1} parent=27 // pred_fallthru
        _
    $region28: #{critic_forward.1} parent=5 // pred_fallthru
      _
    %p715 = scmp.le.s32.totalorder 2, %s8
    // Predicated region
    $region33: #{critic_forward.1} parent=5 // pred_check
      %p716 = pneg %p715
    $region34: #{critic_forward.1} parent=5 // pred_check_branch
      %718 = sbr.rel (%p716) target = $region36
    $region35: #{critic_forward.1} parent=5 // pred_region
      %s719 = ssub.s32 %s8, 2
      // Predicated region
      $region37: #{critic_forward.1} parent=35 // pred_check
        %p720 = pneg %p84
      $region38: #{critic_forward.1} parent=35 // pred_check_branch
        %722 = sbr.rel (%p720) target = $region40
      $region39: #{critic_forward.1} parent=35 // pred_region
        %s723 = smul.u32 16, %s14
        %p724 = scmp.lt.s32.totalorder %s723, 31
        %s725 = scalar_select %p724, %s723, 31
        %s726 = smul.addr %s725, 8
        %s727 = scalar_lea.vmem %s2, %s726
      $region40: #{critic_forward.1} parent=35 // pred_fallthru
        _
    $region36: #{critic_forward.1} parent=5 // pred_fallthru
      _
  $region6: #{critic_forward.1} parent=0 // loop_footer
    %s12 = sadd.s32 1, %s8
  $region7: #{critic_forward.1} parent=0 // loop_footer_branch
    %7 = sbr.rel target = $region3
  $region8: #{critic_forward.1} parent=0 // loop_exit
    _

</llo_original>
